<compile_context>
chip_gen: v5e
topology: v5e:2x2
jax: 0.10.0
libtpu: 0.0.40
codegen_flags: <defaults>
</compile_context>

<pallas_src>
import functools

import jax
import jax.numpy as jnp
import numpy as np
from jax.experimental import pallas as pl
from jax.experimental.pallas import tpu as pltpu


def _log_sigmoid(x):
    # Stable log(sigmoid(x)) = min(x, 0) - log(1 + exp(-|x|)).
    # (log1p would be marginally more precise for tiny exp(-|x|); plain log is used
    #  for guaranteed Mosaic lowering -- absolute error of this form is < 1e-7.)
    return jnp.minimum(x, 0.0) - jnp.log(1.0 + jnp.exp(-jnp.abs(x)))


def _make_skipgram_kernel(batch, num_neg, tile_b):
    def kernel(
        u_idx_ref, v_idx_ref, neg_idx_ref,   # scalar-prefetch refs (SMEM)
        u_tab_ref, v_tab_ref,                # VMEM-resident tables, each [V, D]
        out_ref,                             # [TB, 128] per-tile output block
    ):
        t = pl.program_id(0)
        base = t * tile_b

        eu_rows, ev_rows, ns_rows = [], [], []
        for i in range(tile_b):              # static unroll over the batch tile
            ui = u_idx_ref[base + i]
            vi = v_idx_ref[base + i]
            eu_rows.append(u_tab_ref[pl.ds(ui, 1), :].astype(jnp.float32))
            ev_rows.append(v_tab_ref[pl.ds(vi, 1), :].astype(jnp.float32))
            # Reduce over negatives BEFORE the dot with embed_u.
            nbase = (base + i) * num_neg
            ns = v_tab_ref[pl.ds(neg_idx_ref[nbase], 1), :].astype(jnp.float32)
            for n in range(1, num_neg):
                ns = ns + v_tab_ref[pl.ds(neg_idx_ref[nbase + n], 1), :].astype(
                    jnp.float32
                )
            ns_rows.append(ns)

        eu = jnp.concatenate(eu_rows, axis=0)      # [TB, D]
        ev = jnp.concatenate(ev_rows, axis=0)      # [TB, D]
        nsum = jnp.concatenate(ns_rows, axis=0)    # [TB, D]

        score = jnp.sum(eu * ev, axis=-1, keepdims=True)          # [TB, 1]
        neg_score = jnp.sum(eu * nsum, axis=-1, keepdims=True)    # [TB, 1]
        loss = _log_sigmoid(score) + _log_sigmoid(-neg_score)     # [TB, 1]

        # Zero out rows that are batch padding (B not a multiple of TB).
        row = base + jax.lax.broadcasted_iota(jnp.int32, (tile_b, 1), 0)
        loss = jnp.where(row < batch, loss, 0.0)

        # Lane-dense full-vreg (8, 128) unmasked store; the wrapper reads column 0.
        out_ref[...] = jnp.broadcast_to(loss, (tile_b, 128))

    return kernel


@functools.partial(jax.jit, static_argnames=("batch_size",))
def skipgram_loss(u_weight, v_weight, u_pos, v_pos, v_neg, batch_size):
    (B,) = u_pos.shape
    N = v_neg.shape[1]
    V, D = u_weight.shape

    TB = 8                                   # 8 batch rows = one full vreg of sublanes
    num_tiles = (B + TB - 1) // TB
    B_pad = num_tiles * TB

    table_bytes = (
        u_weight.size * u_weight.dtype.itemsize
        + v_weight.size * v_weight.dtype.itemsize
    )
    if table_bytes > 48 * 1024 * 1024:
        # TODO(synk): manual HBM row-gather fallback for tables exceeding VMEM (v7x: 64 MiB).
        raise NotImplementedError(
            "embedding tables too large for the VMEM-resident gather path"
        )

    # Indices go to SMEM via scalar prefetch; pad batch to a multiple of TB.
    u_idx = jnp.pad(u_pos.astype(jnp.int32), (0, B_pad - B))
    v_idx = jnp.pad(v_pos.astype(jnp.int32), (0, B_pad - B))
    neg_idx = jnp.pad(v_neg.reshape(-1).astype(jnp.int32), (0, (B_pad - B) * N))

    kernel = _make_skipgram_kernel(B, N, TB)

    grid_spec = pltpu.PrefetchScalarGridSpec(
        num_scalar_prefetch=3,
        grid=(num_tiles,),
        in_specs=[
            # Whole embedding tables resident in VMEM (copied on-chip once).
            pl.BlockSpec(memory_space=pltpu.MemorySpace.VMEM),
            pl.BlockSpec(memory_space=pltpu.MemorySpace.VMEM),
        ],
        # Each batch tile owns its output block -> no revisits, axis is parallel.
        out_specs=pl.BlockSpec((TB, 128), lambda t, u_i, v_i, n_i: (t, 0)),
    )

    itemsize = u_weight.dtype.itemsize
    cost = pl.CostEstimate(
        flops=int(B * D * (N + 4)),
        transcendentals=int(4 * B),
        bytes_accessed=int(
            2 * V * D * itemsize + 4 * (2 * B_pad + B_pad * N) + 4 * B_pad * 128
        ),
    )

    out = pl.pallas_call(
        kernel,
        out_shape=jax.ShapeDtypeStruct((B_pad, 128), jnp.float32),
        grid_spec=grid_spec,
        compiler_params=pltpu.CompilerParams(
            dimension_semantics=("parallel",),
            vmem_limit_bytes=64 * 1024 * 1024,
        ),
        cost_estimate=cost,
    )(u_idx, v_idx, neg_idx, u_weight, v_weight)

    # Column 0 holds the per-batch losses; padded rows were zeroed in-kernel.
    # Final reduction + normalization in the wrapper (lets v7x shard the grid).
    return -jnp.sum(out[:, 0]) / batch_size


def _reference_loss(u_weight, v_weight, u_pos, v_pos, v_neg, batch_size):
    embed_u = u_weight[u_pos]
    embed_v = v_weight[v_pos]
    score = jnp.sum(embed_u * embed_v, axis=1)
    log_target = jax.nn.log_sigmoid(score)
    neg_embed_v = v_weight[v_neg]
    neg_score = jnp.einsum("bnd,bd->bn", neg_embed_v, embed_u)
    neg_score = jnp.sum(neg_score, axis=1)
    sum_log_sampled = jax.nn.log_sigmoid(-neg_score)
    loss = log_target + sum_log_sampled
    return -jnp.sum(loss) / batch_size


if __name__ == "__main__":
    vocab_size = 50
    embedding_dim = 32
    batch_size = 8
    num_neg = 5

    key = jax.random.PRNGKey(0)
    k_u, k_v, k_up, k_vp, k_vn = jax.random.split(key, 5)

    initrange = 0.5 / embedding_dim
    u_weight = jax.random.uniform(
        k_u, (vocab_size, embedding_dim), jnp.float32, -initrange, initrange
    )
    # NOTE: the module's init_emb() zeros v_embeddings; small uniform values are used
    # here so the negative-sampling path is numerically exercised.
    v_weight = jax.random.uniform(
        k_v, (vocab_size, embedding_dim), jnp.float32, -initrange, initrange
    )

    u_pos = jax.random.randint(k_up, (batch_size,), 0, vocab_size, jnp.int32)
    v_pos = jax.random.randint(k_vp, (batch_size,), 0, vocab_size, jnp.int32)
    v_neg = jax.random.randint(
        k_vn, (batch_size, num_neg), 0, vocab_size, jnp.int32
    )

    loss = skipgram_loss(u_weight, v_weight, u_pos, v_pos, v_neg, batch_size)
    loss = jax.block_until_ready(loss)

    ref = _reference_loss(u_weight, v_weight, u_pos, v_pos, v_neg, batch_size)
    np.testing.assert_allclose(
        np.asarray(loss), np.asarray(ref), rtol=1e-5, atol=1e-6
    )

    print("KERNEL_OK")
</pallas_src>

<mosaic_0001>
module attributes {stable_mosaic.version = 11 : i64} {
  func.func @kernel(%arg0: i32, %arg1: memref<8xi32, #tpu.memory_space<smem>>, %arg2: memref<8xi32, #tpu.memory_space<smem>>, %arg3: memref<40xi32, #tpu.memory_space<smem>>, %arg4: memref<50x32xf32, #tpu.memory_space<vmem>>, %arg5: memref<50x32xf32, #tpu.memory_space<vmem>>, %arg6: memref<8x128xf32, #tpu.memory_space<vmem>>) attributes {dimension_semantics = [#tpu.dimension_semantics<parallel>], iteration_bounds = array<i64: 1>, scalar_prefetch = 3 : i64, scratch_operands = 0 : i64, tpu.core_type = #tpu.core_type<tc>, window_params = [{pipeline_mode = #tpu.pipeline_mode<synchronous>, transform_indices = @transform_0, window_bounds = array<i64: 50, 32>}, {pipeline_mode = #tpu.pipeline_mode<synchronous>, transform_indices = @transform_1, window_bounds = array<i64: 50, 32>}, {transform_indices = @transform_2, window_bounds = array<i64: 8, 128>}]} {
    %c8_i32 = arith.constant 8 : i32
    %0 = arith.muli %arg0, %c8_i32 : i32
    %c0_i32 = arith.constant 0 : i32
    %1 = arith.addi %0, %c0_i32 : i32
    %2 = arith.index_cast %1 : i32 to index
    %3 = memref.load %arg1[%2] : memref<8xi32, #tpu.memory_space<smem>>
    %c0_i32_0 = arith.constant 0 : i32
    %4 = arith.addi %0, %c0_i32_0 : i32
    %5 = arith.index_cast %4 : i32 to index
    %6 = memref.load %arg2[%5] : memref<8xi32, #tpu.memory_space<smem>>
    %7 = arith.index_cast %3 : i32 to index
    %c0 = arith.constant 0 : index
    %8 = vector.load %arg4[%7, %c0] : memref<50x32xf32, #tpu.memory_space<vmem>>, vector<1x32xf32>
    %9 = arith.index_cast %6 : i32 to index
    %c0_1 = arith.constant 0 : index
    %10 = vector.load %arg5[%9, %c0_1] : memref<50x32xf32, #tpu.memory_space<vmem>>, vector<1x32xf32>
    %c0_i32_2 = arith.constant 0 : i32
    %11 = arith.addi %0, %c0_i32_2 : i32
    %c5_i32 = arith.constant 5 : i32
    %12 = arith.muli %11, %c5_i32 : i32
    %13 = arith.index_cast %12 : i32 to index
    %14 = memref.load %arg3[%13] : memref<40xi32, #tpu.memory_space<smem>>
    %15 = arith.index_cast %14 : i32 to index
    %c0_3 = arith.constant 0 : index
    %16 = vector.load %arg5[%15, %c0_3] : memref<50x32xf32, #tpu.memory_space<vmem>>, vector<1x32xf32>
    %c1_i32 = arith.constant 1 : i32
    %17 = arith.addi %12, %c1_i32 : i32
    %18 = arith.index_cast %17 : i32 to index
    %19 = memref.load %arg3[%18] : memref<40xi32, #tpu.memory_space<smem>>
    %20 = arith.index_cast %19 : i32 to index
    %c0_4 = arith.constant 0 : index
    %21 = vector.load %arg5[%20, %c0_4] : memref<50x32xf32, #tpu.memory_space<vmem>>, vector<1x32xf32>
    %22 = arith.addf %16, %21 : vector<1x32xf32>
    %c2_i32 = arith.constant 2 : i32
    %23 = arith.addi %12, %c2_i32 : i32
    %24 = arith.index_cast %23 : i32 to index
    %25 = memref.load %arg3[%24] : memref<40xi32, #tpu.memory_space<smem>>
    %26 = arith.index_cast %25 : i32 to index
    %c0_5 = arith.constant 0 : index
    %27 = vector.load %arg5[%26, %c0_5] : memref<50x32xf32, #tpu.memory_space<vmem>>, vector<1x32xf32>
    %28 = arith.addf %22, %27 : vector<1x32xf32>
    %c3_i32 = arith.constant 3 : i32
    %29 = arith.addi %12, %c3_i32 : i32
    %30 = arith.index_cast %29 : i32 to index
    %31 = memref.load %arg3[%30] : memref<40xi32, #tpu.memory_space<smem>>
    %32 = arith.index_cast %31 : i32 to index
    %c0_6 = arith.constant 0 : index
    %33 = vector.load %arg5[%32, %c0_6] : memref<50x32xf32, #tpu.memory_space<vmem>>, vector<1x32xf32>
    %34 = arith.addf %28, %33 : vector<1x32xf32>
    %c4_i32 = arith.constant 4 : i32
    %35 = arith.addi %12, %c4_i32 : i32
    %36 = arith.index_cast %35 : i32 to index
    %37 = memref.load %arg3[%36] : memref<40xi32, #tpu.memory_space<smem>>
    %38 = arith.index_cast %37 : i32 to index
    %c0_7 = arith.constant 0 : index
    %39 = vector.load %arg5[%38, %c0_7] : memref<50x32xf32, #tpu.memory_space<vmem>>, vector<1x32xf32>
    %40 = arith.addf %34, %39 : vector<1x32xf32>
    %c1_i32_8 = arith.constant 1 : i32
    %41 = arith.addi %0, %c1_i32_8 : i32
    %42 = arith.index_cast %41 : i32 to index
    %43 = memref.load %arg1[%42] : memref<8xi32, #tpu.memory_space<smem>>
    %c1_i32_9 = arith.constant 1 : i32
    %44 = arith.addi %0, %c1_i32_9 : i32
    %45 = arith.index_cast %44 : i32 to index
    %46 = memref.load %arg2[%45] : memref<8xi32, #tpu.memory_space<smem>>
    %47 = arith.index_cast %43 : i32 to index
    %c0_10 = arith.constant 0 : index
    %48 = vector.load %arg4[%47, %c0_10] : memref<50x32xf32, #tpu.memory_space<vmem>>, vector<1x32xf32>
    %49 = arith.index_cast %46 : i32 to index
    %c0_11 = arith.constant 0 : index
    %50 = vector.load %arg5[%49, %c0_11] : memref<50x32xf32, #tpu.memory_space<vmem>>, vector<1x32xf32>
    %c1_i32_12 = arith.constant 1 : i32
    %51 = arith.addi %0, %c1_i32_12 : i32
    %c5_i32_13 = arith.constant 5 : i32
    %52 = arith.muli %51, %c5_i32_13 : i32
    %53 = arith.index_cast %52 : i32 to index
    %54 = memref.load %arg3[%53] : memref<40xi32, #tpu.memory_space<smem>>
    %55 = arith.index_cast %54 : i32 to index
    %c0_14 = arith.constant 0 : index
    %56 = vector.load %arg5[%55, %c0_14] : memref<50x32xf32, #tpu.memory_space<vmem>>, vector<1x32xf32>
    %c1_i32_15 = arith.constant 1 : i32
    %57 = arith.addi %52, %c1_i32_15 : i32
    %58 = arith.index_cast %57 : i32 to index
    %59 = memref.load %arg3[%58] : memref<40xi32, #tpu.memory_space<smem>>
    %60 = arith.index_cast %59 : i32 to index
    %c0_16 = arith.constant 0 : index
    %61 = vector.load %arg5[%60, %c0_16] : memref<50x32xf32, #tpu.memory_space<vmem>>, vector<1x32xf32>
    %62 = arith.addf %56, %61 : vector<1x32xf32>
    %c2_i32_17 = arith.constant 2 : i32
    %63 = arith.addi %52, %c2_i32_17 : i32
    %64 = arith.index_cast %63 : i32 to index
    %65 = memref.load %arg3[%64] : memref<40xi32, #tpu.memory_space<smem>>
    %66 = arith.index_cast %65 : i32 to index
    %c0_18 = arith.constant 0 : index
    %67 = vector.load %arg5[%66, %c0_18] : memref<50x32xf32, #tpu.memory_space<vmem>>, vector<1x32xf32>
    %68 = arith.addf %62, %67 : vector<1x32xf32>
    %c3_i32_19 = arith.constant 3 : i32
    %69 = arith.addi %52, %c3_i32_19 : i32
    %70 = arith.index_cast %69 : i32 to index
    %71 = memref.load %arg3[%70] : memref<40xi32, #tpu.memory_space<smem>>
    %72 = arith.index_cast %71 : i32 to index
    %c0_20 = arith.constant 0 : index
    %73 = vector.load %arg5[%72, %c0_20] : memref<50x32xf32, #tpu.memory_space<vmem>>, vector<1x32xf32>
    %74 = arith.addf %68, %73 : vector<1x32xf32>
    %c4_i32_21 = arith.constant 4 : i32
    %75 = arith.addi %52, %c4_i32_21 : i32
    %76 = arith.index_cast %75 : i32 to index
    %77 = memref.load %arg3[%76] : memref<40xi32, #tpu.memory_space<smem>>
    %78 = arith.index_cast %77 : i32 to index
    %c0_22 = arith.constant 0 : index
    %79 = vector.load %arg5[%78, %c0_22] : memref<50x32xf32, #tpu.memory_space<vmem>>, vector<1x32xf32>
    %80 = arith.addf %74, %79 : vector<1x32xf32>
    %c2_i32_23 = arith.constant 2 : i32
    %81 = arith.addi %0, %c2_i32_23 : i32
    %82 = arith.index_cast %81 : i32 to index
    %83 = memref.load %arg1[%82] : memref<8xi32, #tpu.memory_space<smem>>
    %c2_i32_24 = arith.constant 2 : i32
    %84 = arith.addi %0, %c2_i32_24 : i32
    %85 = arith.index_cast %84 : i32 to index
    %86 = memref.load %arg2[%85] : memref<8xi32, #tpu.memory_space<smem>>
    %87 = arith.index_cast %83 : i32 to index
    %c0_25 = arith.constant 0 : index
    %88 = vector.load %arg4[%87, %c0_25] : memref<50x32xf32, #tpu.memory_space<vmem>>, vector<1x32xf32>
    %89 = arith.index_cast %86 : i32 to index
    %c0_26 = arith.constant 0 : index
    %90 = vector.load %arg5[%89, %c0_26] : memref<50x32xf32, #tpu.memory_space<vmem>>, vector<1x32xf32>
    %c2_i32_27 = arith.constant 2 : i32
    %91 = arith.addi %0, %c2_i32_27 : i32
    %c5_i32_28 = arith.constant 5 : i32
    %92 = arith.muli %91, %c5_i32_28 : i32
    %93 = arith.index_cast %92 : i32 to index
    %94 = memref.load %arg3[%93] : memref<40xi32, #tpu.memory_space<smem>>
    %95 = arith.index_cast %94 : i32 to index
    %c0_29 = arith.constant 0 : index
    %96 = vector.load %arg5[%95, %c0_29] : memref<50x32xf32, #tpu.memory_space<vmem>>, vector<1x32xf32>
    %c1_i32_30 = arith.constant 1 : i32
    %97 = arith.addi %92, %c1_i32_30 : i32
    %98 = arith.index_cast %97 : i32 to index
    %99 = memref.load %arg3[%98] : memref<40xi32, #tpu.memory_space<smem>>
    %100 = arith.index_cast %99 : i32 to index
    %c0_31 = arith.constant 0 : index
    %101 = vector.load %arg5[%100, %c0_31] : memref<50x32xf32, #tpu.memory_space<vmem>>, vector<1x32xf32>
    %102 = arith.addf %96, %101 : vector<1x32xf32>
    %c2_i32_32 = arith.constant 2 : i32
    %103 = arith.addi %92, %c2_i32_32 : i32
    %104 = arith.index_cast %103 : i32 to index
    %105 = memref.load %arg3[%104] : memref<40xi32, #tpu.memory_space<smem>>
    %106 = arith.index_cast %105 : i32 to index
    %c0_33 = arith.constant 0 : index
    %107 = vector.load %arg5[%106, %c0_33] : memref<50x32xf32, #tpu.memory_space<vmem>>, vector<1x32xf32>
    %108 = arith.addf %102, %107 : vector<1x32xf32>
    %c3_i32_34 = arith.constant 3 : i32
    %109 = arith.addi %92, %c3_i32_34 : i32
    %110 = arith.index_cast %109 : i32 to index
    %111 = memref.load %arg3[%110] : memref<40xi32, #tpu.memory_space<smem>>
    %112 = arith.index_cast %111 : i32 to index
    %c0_35 = arith.constant 0 : index
    %113 = vector.load %arg5[%112, %c0_35] : memref<50x32xf32, #tpu.memory_space<vmem>>, vector<1x32xf32>
    %114 = arith.addf %108, %113 : vector<1x32xf32>
    %c4_i32_36 = arith.constant 4 : i32
    %115 = arith.addi %92, %c4_i32_36 : i32
    %116 = arith.index_cast %115 : i32 to index
    %117 = memref.load %arg3[%116] : memref<40xi32, #tpu.memory_space<smem>>
    %118 = arith.index_cast %117 : i32 to index
    %c0_37 = arith.constant 0 : index
    %119 = vector.load %arg5[%118, %c0_37] : memref<50x32xf32, #tpu.memory_space<vmem>>, vector<1x32xf32>
    %120 = arith.addf %114, %119 : vector<1x32xf32>
    %c3_i32_38 = arith.constant 3 : i32
    %121 = arith.addi %0, %c3_i32_38 : i32
    %122 = arith.index_cast %121 : i32 to index
    %123 = memref.load %arg1[%122] : memref<8xi32, #tpu.memory_space<smem>>
    %c3_i32_39 = arith.constant 3 : i32
    %124 = arith.addi %0, %c3_i32_39 : i32
    %125 = arith.index_cast %124 : i32 to index
    %126 = memref.load %arg2[%125] : memref<8xi32, #tpu.memory_space<smem>>
    %127 = arith.index_cast %123 : i32 to index
    %c0_40 = arith.constant 0 : index
    %128 = vector.load %arg4[%127, %c0_40] : memref<50x32xf32, #tpu.memory_space<vmem>>, vector<1x32xf32>
    %129 = arith.index_cast %126 : i32 to index
    %c0_41 = arith.constant 0 : index
    %130 = vector.load %arg5[%129, %c0_41] : memref<50x32xf32, #tpu.memory_space<vmem>>, vector<1x32xf32>
    %c3_i32_42 = arith.constant 3 : i32
    %131 = arith.addi %0, %c3_i32_42 : i32
    %c5_i32_43 = arith.constant 5 : i32
    %132 = arith.muli %131, %c5_i32_43 : i32
    %133 = arith.index_cast %132 : i32 to index
    %134 = memref.load %arg3[%133] : memref<40xi32, #tpu.memory_space<smem>>
    %135 = arith.index_cast %134 : i32 to index
    %c0_44 = arith.constant 0 : index
    %136 = vector.load %arg5[%135, %c0_44] : memref<50x32xf32, #tpu.memory_space<vmem>>, vector<1x32xf32>
    %c1_i32_45 = arith.constant 1 : i32
    %137 = arith.addi %132, %c1_i32_45 : i32
    %138 = arith.index_cast %137 : i32 to index
    %139 = memref.load %arg3[%138] : memref<40xi32, #tpu.memory_space<smem>>
    %140 = arith.index_cast %139 : i32 to index
    %c0_46 = arith.constant 0 : index
    %141 = vector.load %arg5[%140, %c0_46] : memref<50x32xf32, #tpu.memory_space<vmem>>, vector<1x32xf32>
    %142 = arith.addf %136, %141 : vector<1x32xf32>
    %c2_i32_47 = arith.constant 2 : i32
    %143 = arith.addi %132, %c2_i32_47 : i32
    %144 = arith.index_cast %143 : i32 to index
    %145 = memref.load %arg3[%144] : memref<40xi32, #tpu.memory_space<smem>>
    %146 = arith.index_cast %145 : i32 to index
    %c0_48 = arith.constant 0 : index
    %147 = vector.load %arg5[%146, %c0_48] : memref<50x32xf32, #tpu.memory_space<vmem>>, vector<1x32xf32>
    %148 = arith.addf %142, %147 : vector<1x32xf32>
    %c3_i32_49 = arith.constant 3 : i32
    %149 = arith.addi %132, %c3_i32_49 : i32
    %150 = arith.index_cast %149 : i32 to index
    %151 = memref.load %arg3[%150] : memref<40xi32, #tpu.memory_space<smem>>
    %152 = arith.index_cast %151 : i32 to index
    %c0_50 = arith.constant 0 : index
    %153 = vector.load %arg5[%152, %c0_50] : memref<50x32xf32, #tpu.memory_space<vmem>>, vector<1x32xf32>
    %154 = arith.addf %148, %153 : vector<1x32xf32>
    %c4_i32_51 = arith.constant 4 : i32
    %155 = arith.addi %132, %c4_i32_51 : i32
    %156 = arith.index_cast %155 : i32 to index
    %157 = memref.load %arg3[%156] : memref<40xi32, #tpu.memory_space<smem>>
    %158 = arith.index_cast %157 : i32 to index
    %c0_52 = arith.constant 0 : index
    %159 = vector.load %arg5[%158, %c0_52] : memref<50x32xf32, #tpu.memory_space<vmem>>, vector<1x32xf32>
    %160 = arith.addf %154, %159 : vector<1x32xf32>
    %c4_i32_53 = arith.constant 4 : i32
    %161 = arith.addi %0, %c4_i32_53 : i32
    %162 = arith.index_cast %161 : i32 to index
    %163 = memref.load %arg1[%162] : memref<8xi32, #tpu.memory_space<smem>>
    %c4_i32_54 = arith.constant 4 : i32
    %164 = arith.addi %0, %c4_i32_54 : i32
    %165 = arith.index_cast %164 : i32 to index
    %166 = memref.load %arg2[%165] : memref<8xi32, #tpu.memory_space<smem>>
    %167 = arith.index_cast %163 : i32 to index
    %c0_55 = arith.constant 0 : index
    %168 = vector.load %arg4[%167, %c0_55] : memref<50x32xf32, #tpu.memory_space<vmem>>, vector<1x32xf32>
    %169 = arith.index_cast %166 : i32 to index
    %c0_56 = arith.constant 0 : index
    %170 = vector.load %arg5[%169, %c0_56] : memref<50x32xf32, #tpu.memory_space<vmem>>, vector<1x32xf32>
    %c4_i32_57 = arith.constant 4 : i32
    %171 = arith.addi %0, %c4_i32_57 : i32
    %c5_i32_58 = arith.constant 5 : i32
    %172 = arith.muli %171, %c5_i32_58 : i32
    %173 = arith.index_cast %172 : i32 to index
    %174 = memref.load %arg3[%173] : memref<40xi32, #tpu.memory_space<smem>>
    %175 = arith.index_cast %174 : i32 to index
    %c0_59 = arith.constant 0 : index
    %176 = vector.load %arg5[%175, %c0_59] : memref<50x32xf32, #tpu.memory_space<vmem>>, vector<1x32xf32>
    %c1_i32_60 = arith.constant 1 : i32
    %177 = arith.addi %172, %c1_i32_60 : i32
    %178 = arith.index_cast %177 : i32 to index
    %179 = memref.load %arg3[%178] : memref<40xi32, #tpu.memory_space<smem>>
    %180 = arith.index_cast %179 : i32 to index
    %c0_61 = arith.constant 0 : index
    %181 = vector.load %arg5[%180, %c0_61] : memref<50x32xf32, #tpu.memory_space<vmem>>, vector<1x32xf32>
    %182 = arith.addf %176, %181 : vector<1x32xf32>
    %c2_i32_62 = arith.constant 2 : i32
    %183 = arith.addi %172, %c2_i32_62 : i32
    %184 = arith.index_cast %183 : i32 to index
    %185 = memref.load %arg3[%184] : memref<40xi32, #tpu.memory_space<smem>>
    %186 = arith.index_cast %185 : i32 to index
    %c0_63 = arith.constant 0 : index
    %187 = vector.load %arg5[%186, %c0_63] : memref<50x32xf32, #tpu.memory_space<vmem>>, vector<1x32xf32>
    %188 = arith.addf %182, %187 : vector<1x32xf32>
    %c3_i32_64 = arith.constant 3 : i32
    %189 = arith.addi %172, %c3_i32_64 : i32
    %190 = arith.index_cast %189 : i32 to index
    %191 = memref.load %arg3[%190] : memref<40xi32, #tpu.memory_space<smem>>
    %192 = arith.index_cast %191 : i32 to index
    %c0_65 = arith.constant 0 : index
    %193 = vector.load %arg5[%192, %c0_65] : memref<50x32xf32, #tpu.memory_space<vmem>>, vector<1x32xf32>
    %194 = arith.addf %188, %193 : vector<1x32xf32>
    %c4_i32_66 = arith.constant 4 : i32
    %195 = arith.addi %172, %c4_i32_66 : i32
    %196 = arith.index_cast %195 : i32 to index
    %197 = memref.load %arg3[%196] : memref<40xi32, #tpu.memory_space<smem>>
    %198 = arith.index_cast %197 : i32 to index
    %c0_67 = arith.constant 0 : index
    %199 = vector.load %arg5[%198, %c0_67] : memref<50x32xf32, #tpu.memory_space<vmem>>, vector<1x32xf32>
    %200 = arith.addf %194, %199 : vector<1x32xf32>
    %c5_i32_68 = arith.constant 5 : i32
    %201 = arith.addi %0, %c5_i32_68 : i32
    %202 = arith.index_cast %201 : i32 to index
    %203 = memref.load %arg1[%202] : memref<8xi32, #tpu.memory_space<smem>>
    %c5_i32_69 = arith.constant 5 : i32
    %204 = arith.addi %0, %c5_i32_69 : i32
    %205 = arith.index_cast %204 : i32 to index
    %206 = memref.load %arg2[%205] : memref<8xi32, #tpu.memory_space<smem>>
    %207 = arith.index_cast %203 : i32 to index
    %c0_70 = arith.constant 0 : index
    %208 = vector.load %arg4[%207, %c0_70] : memref<50x32xf32, #tpu.memory_space<vmem>>, vector<1x32xf32>
    %209 = arith.index_cast %206 : i32 to index
    %c0_71 = arith.constant 0 : index
    %210 = vector.load %arg5[%209, %c0_71] : memref<50x32xf32, #tpu.memory_space<vmem>>, vector<1x32xf32>
    %c5_i32_72 = arith.constant 5 : i32
    %211 = arith.addi %0, %c5_i32_72 : i32
    %c5_i32_73 = arith.constant 5 : i32
    %212 = arith.muli %211, %c5_i32_73 : i32
    %213 = arith.index_cast %212 : i32 to index
    %214 = memref.load %arg3[%213] : memref<40xi32, #tpu.memory_space<smem>>
    %215 = arith.index_cast %214 : i32 to index
    %c0_74 = arith.constant 0 : index
    %216 = vector.load %arg5[%215, %c0_74] : memref<50x32xf32, #tpu.memory_space<vmem>>, vector<1x32xf32>
    %c1_i32_75 = arith.constant 1 : i32
    %217 = arith.addi %212, %c1_i32_75 : i32
    %218 = arith.index_cast %217 : i32 to index
    %219 = memref.load %arg3[%218] : memref<40xi32, #tpu.memory_space<smem>>
    %220 = arith.index_cast %219 : i32 to index
    %c0_76 = arith.constant 0 : index
    %221 = vector.load %arg5[%220, %c0_76] : memref<50x32xf32, #tpu.memory_space<vmem>>, vector<1x32xf32>
    %222 = arith.addf %216, %221 : vector<1x32xf32>
    %c2_i32_77 = arith.constant 2 : i32
    %223 = arith.addi %212, %c2_i32_77 : i32
    %224 = arith.index_cast %223 : i32 to index
    %225 = memref.load %arg3[%224] : memref<40xi32, #tpu.memory_space<smem>>
    %226 = arith.index_cast %225 : i32 to index
    %c0_78 = arith.constant 0 : index
    %227 = vector.load %arg5[%226, %c0_78] : memref<50x32xf32, #tpu.memory_space<vmem>>, vector<1x32xf32>
    %228 = arith.addf %222, %227 : vector<1x32xf32>
    %c3_i32_79 = arith.constant 3 : i32
    %229 = arith.addi %212, %c3_i32_79 : i32
    %230 = arith.index_cast %229 : i32 to index
    %231 = memref.load %arg3[%230] : memref<40xi32, #tpu.memory_space<smem>>
    %232 = arith.index_cast %231 : i32 to index
    %c0_80 = arith.constant 0 : index
    %233 = vector.load %arg5[%232, %c0_80] : memref<50x32xf32, #tpu.memory_space<vmem>>, vector<1x32xf32>
    %234 = arith.addf %228, %233 : vector<1x32xf32>
    %c4_i32_81 = arith.constant 4 : i32
    %235 = arith.addi %212, %c4_i32_81 : i32
    %236 = arith.index_cast %235 : i32 to index
    %237 = memref.load %arg3[%236] : memref<40xi32, #tpu.memory_space<smem>>
    %238 = arith.index_cast %237 : i32 to index
    %c0_82 = arith.constant 0 : index
    %239 = vector.load %arg5[%238, %c0_82] : memref<50x32xf32, #tpu.memory_space<vmem>>, vector<1x32xf32>
    %240 = arith.addf %234, %239 : vector<1x32xf32>
    %c6_i32 = arith.constant 6 : i32
    %241 = arith.addi %0, %c6_i32 : i32
    %242 = arith.index_cast %241 : i32 to index
    %243 = memref.load %arg1[%242] : memref<8xi32, #tpu.memory_space<smem>>
    %c6_i32_83 = arith.constant 6 : i32
    %244 = arith.addi %0, %c6_i32_83 : i32
    %245 = arith.index_cast %244 : i32 to index
    %246 = memref.load %arg2[%245] : memref<8xi32, #tpu.memory_space<smem>>
    %247 = arith.index_cast %243 : i32 to index
    %c0_84 = arith.constant 0 : index
    %248 = vector.load %arg4[%247, %c0_84] : memref<50x32xf32, #tpu.memory_space<vmem>>, vector<1x32xf32>
    %249 = arith.index_cast %246 : i32 to index
    %c0_85 = arith.constant 0 : index
    %250 = vector.load %arg5[%249, %c0_85] : memref<50x32xf32, #tpu.memory_space<vmem>>, vector<1x32xf32>
    %c6_i32_86 = arith.constant 6 : i32
    %251 = arith.addi %0, %c6_i32_86 : i32
    %c5_i32_87 = arith.constant 5 : i32
    %252 = arith.muli %251, %c5_i32_87 : i32
    %253 = arith.index_cast %252 : i32 to index
    %254 = memref.load %arg3[%253] : memref<40xi32, #tpu.memory_space<smem>>
    %255 = arith.index_cast %254 : i32 to index
    %c0_88 = arith.constant 0 : index
    %256 = vector.load %arg5[%255, %c0_88] : memref<50x32xf32, #tpu.memory_space<vmem>>, vector<1x32xf32>
    %c1_i32_89 = arith.constant 1 : i32
    %257 = arith.addi %252, %c1_i32_89 : i32
    %258 = arith.index_cast %257 : i32 to index
    %259 = memref.load %arg3[%258] : memref<40xi32, #tpu.memory_space<smem>>
    %260 = arith.index_cast %259 : i32 to index
    %c0_90 = arith.constant 0 : index
    %261 = vector.load %arg5[%260, %c0_90] : memref<50x32xf32, #tpu.memory_space<vmem>>, vector<1x32xf32>
    %262 = arith.addf %256, %261 : vector<1x32xf32>
    %c2_i32_91 = arith.constant 2 : i32
    %263 = arith.addi %252, %c2_i32_91 : i32
    %264 = arith.index_cast %263 : i32 to index
    %265 = memref.load %arg3[%264] : memref<40xi32, #tpu.memory_space<smem>>
    %266 = arith.index_cast %265 : i32 to index
    %c0_92 = arith.constant 0 : index
    %267 = vector.load %arg5[%266, %c0_92] : memref<50x32xf32, #tpu.memory_space<vmem>>, vector<1x32xf32>
    %268 = arith.addf %262, %267 : vector<1x32xf32>
    %c3_i32_93 = arith.constant 3 : i32
    %269 = arith.addi %252, %c3_i32_93 : i32
    %270 = arith.index_cast %269 : i32 to index
    %271 = memref.load %arg3[%270] : memref<40xi32, #tpu.memory_space<smem>>
    %272 = arith.index_cast %271 : i32 to index
    %c0_94 = arith.constant 0 : index
    %273 = vector.load %arg5[%272, %c0_94] : memref<50x32xf32, #tpu.memory_space<vmem>>, vector<1x32xf32>
    %274 = arith.addf %268, %273 : vector<1x32xf32>
    %c4_i32_95 = arith.constant 4 : i32
    %275 = arith.addi %252, %c4_i32_95 : i32
    %276 = arith.index_cast %275 : i32 to index
    %277 = memref.load %arg3[%276] : memref<40xi32, #tpu.memory_space<smem>>
    %278 = arith.index_cast %277 : i32 to index
    %c0_96 = arith.constant 0 : index
    %279 = vector.load %arg5[%278, %c0_96] : memref<50x32xf32, #tpu.memory_space<vmem>>, vector<1x32xf32>
    %280 = arith.addf %274, %279 : vector<1x32xf32>
    %c7_i32 = arith.constant 7 : i32
    %281 = arith.addi %0, %c7_i32 : i32
    %282 = arith.index_cast %281 : i32 to index
    %283 = memref.load %arg1[%282] : memref<8xi32, #tpu.memory_space<smem>>
    %c7_i32_97 = arith.constant 7 : i32
    %284 = arith.addi %0, %c7_i32_97 : i32
    %285 = arith.index_cast %284 : i32 to index
    %286 = memref.load %arg2[%285] : memref<8xi32, #tpu.memory_space<smem>>
    %287 = arith.index_cast %283 : i32 to index
    %c0_98 = arith.constant 0 : index
    %288 = vector.load %arg4[%287, %c0_98] : memref<50x32xf32, #tpu.memory_space<vmem>>, vector<1x32xf32>
    %289 = arith.index_cast %286 : i32 to index
    %c0_99 = arith.constant 0 : index
    %290 = vector.load %arg5[%289, %c0_99] : memref<50x32xf32, #tpu.memory_space<vmem>>, vector<1x32xf32>
    %c7_i32_100 = arith.constant 7 : i32
    %291 = arith.addi %0, %c7_i32_100 : i32
    %c5_i32_101 = arith.constant 5 : i32
    %292 = arith.muli %291, %c5_i32_101 : i32
    %293 = arith.index_cast %292 : i32 to index
    %294 = memref.load %arg3[%293] : memref<40xi32, #tpu.memory_space<smem>>
    %295 = arith.index_cast %294 : i32 to index
    %c0_102 = arith.constant 0 : index
    %296 = vector.load %arg5[%295, %c0_102] : memref<50x32xf32, #tpu.memory_space<vmem>>, vector<1x32xf32>
    %c1_i32_103 = arith.constant 1 : i32
    %297 = arith.addi %292, %c1_i32_103 : i32
    %298 = arith.index_cast %297 : i32 to index
    %299 = memref.load %arg3[%298] : memref<40xi32, #tpu.memory_space<smem>>
    %300 = arith.index_cast %299 : i32 to index
    %c0_104 = arith.constant 0 : index
    %301 = vector.load %arg5[%300, %c0_104] : memref<50x32xf32, #tpu.memory_space<vmem>>, vector<1x32xf32>
    %302 = arith.addf %296, %301 : vector<1x32xf32>
    %c2_i32_105 = arith.constant 2 : i32
    %303 = arith.addi %292, %c2_i32_105 : i32
    %304 = arith.index_cast %303 : i32 to index
    %305 = memref.load %arg3[%304] : memref<40xi32, #tpu.memory_space<smem>>
    %306 = arith.index_cast %305 : i32 to index
    %c0_106 = arith.constant 0 : index
    %307 = vector.load %arg5[%306, %c0_106] : memref<50x32xf32, #tpu.memory_space<vmem>>, vector<1x32xf32>
    %308 = arith.addf %302, %307 : vector<1x32xf32>
    %c3_i32_107 = arith.constant 3 : i32
    %309 = arith.addi %292, %c3_i32_107 : i32
    %310 = arith.index_cast %309 : i32 to index
    %311 = memref.load %arg3[%310] : memref<40xi32, #tpu.memory_space<smem>>
    %312 = arith.index_cast %311 : i32 to index
    %c0_108 = arith.constant 0 : index
    %313 = vector.load %arg5[%312, %c0_108] : memref<50x32xf32, #tpu.memory_space<vmem>>, vector<1x32xf32>
    %314 = arith.addf %308, %313 : vector<1x32xf32>
    %c4_i32_109 = arith.constant 4 : i32
    %315 = arith.addi %292, %c4_i32_109 : i32
    %316 = arith.index_cast %315 : i32 to index
    %317 = memref.load %arg3[%316] : memref<40xi32, #tpu.memory_space<smem>>
    %318 = arith.index_cast %317 : i32 to index
    %c0_110 = arith.constant 0 : index
    %319 = vector.load %arg5[%318, %c0_110] : memref<50x32xf32, #tpu.memory_space<vmem>>, vector<1x32xf32>
    %320 = arith.addf %314, %319 : vector<1x32xf32>
    %321 = tpu.concatenate %8, %48, %88, %128, %168, %208, %248, %288 in 0 : vector<1x32xf32>, vector<1x32xf32>, vector<1x32xf32>, vector<1x32xf32>, vector<1x32xf32>, vector<1x32xf32>, vector<1x32xf32>, vector<1x32xf32> -> vector<8x32xf32>
    %322 = tpu.concatenate %10, %50, %90, %130, %170, %210, %250, %290 in 0 : vector<1x32xf32>, vector<1x32xf32>, vector<1x32xf32>, vector<1x32xf32>, vector<1x32xf32>, vector<1x32xf32>, vector<1x32xf32>, vector<1x32xf32> -> vector<8x32xf32>
    %323 = tpu.concatenate %40, %80, %120, %160, %200, %240, %280, %320 in 0 : vector<1x32xf32>, vector<1x32xf32>, vector<1x32xf32>, vector<1x32xf32>, vector<1x32xf32>, vector<1x32xf32>, vector<1x32xf32>, vector<1x32xf32> -> vector<8x32xf32>
    %324 = arith.mulf %321, %322 : vector<8x32xf32>
    %cst = arith.constant dense<0.000000e+00> : vector<8xf32>
    %325 = vector.multi_reduction <add>, %324, %cst [1] : vector<8x32xf32> to vector<8xf32>
    %326 = vector.shape_cast %325 : vector<8xf32> to vector<8x1xf32>
    %327 = arith.mulf %321, %323 : vector<8x32xf32>
    %cst_111 = arith.constant dense<0.000000e+00> : vector<8xf32>
    %328 = vector.multi_reduction <add>, %327, %cst_111 [1] : vector<8x32xf32> to vector<8xf32>
    %329 = vector.shape_cast %328 : vector<8xf32> to vector<8x1xf32>
    %cst_112 = arith.constant 0.000000e+00 : f32
    %330 = vector.broadcast %cst_112 : f32 to vector<8x1xf32>
    %331 = arith.minimumf %326, %330 : vector<8x1xf32>
    %332 = math.absf %326 : vector<8x1xf32>
    %cst_113 = arith.constant 0.000000e+00 : f32
    %333 = vector.broadcast %cst_113 : f32 to vector<8x1xf32>
    %334 = arith.subf %333, %332 : vector<8x1xf32>
    %335 = math.exp %334 : vector<8x1xf32>
    %cst_114 = arith.constant 1.000000e+00 : f32
    %336 = vector.broadcast %cst_114 : f32 to vector<8x1xf32>
    %337 = arith.addf %336, %335 : vector<8x1xf32>
    %338 = math.log %337 : vector<8x1xf32>
    %339 = arith.subf %331, %338 : vector<8x1xf32>
    %cst_115 = arith.constant 0.000000e+00 : f32
    %340 = vector.broadcast %cst_115 : f32 to vector<8x1xf32>
    %341 = arith.subf %340, %329 : vector<8x1xf32>
    %cst_116 = arith.constant 0.000000e+00 : f32
    %342 = vector.broadcast %cst_116 : f32 to vector<8x1xf32>
    %343 = arith.minimumf %341, %342 : vector<8x1xf32>
    %344 = math.absf %341 : vector<8x1xf32>
    %cst_117 = arith.constant 0.000000e+00 : f32
    %345 = vector.broadcast %cst_117 : f32 to vector<8x1xf32>
    %346 = arith.subf %345, %344 : vector<8x1xf32>
    %347 = math.exp %346 : vector<8x1xf32>
    %cst_118 = arith.constant 1.000000e+00 : f32
    %348 = vector.broadcast %cst_118 : f32 to vector<8x1xf32>
    %349 = arith.addf %348, %347 : vector<8x1xf32>
    %350 = math.log %349 : vector<8x1xf32>
    %351 = arith.subf %343, %350 : vector<8x1xf32>
    %352 = arith.addf %339, %351 : vector<8x1xf32>
    %353 = tpu.iota {dimensions = array<i32: 0>} : vector<8x1xi32>
    %354 = vector.broadcast %0 : i32 to vector<8x1xi32>
    %355 = arith.addi %354, %353 : vector<8x1xi32>
    %c8_i32_119 = arith.constant 8 : i32
    %356 = vector.broadcast %c8_i32_119 : i32 to vector<8x1xi32>
    %357 = arith.cmpi slt, %355, %356 : vector<8x1xi32>
    %cst_120 = arith.constant 0.000000e+00 : f32
    %358 = vector.broadcast %cst_120 : f32 to vector<8x1xf32>
    %359 = arith.select %357, %352, %358 : vector<8x1xi1>, vector<8x1xf32>
    %360 = vector.shape_cast %359 : vector<8x1xf32> to vector<8x1xf32>
    %361 = vector.broadcast %360 : vector<8x1xf32> to vector<8x128xf32>
    %c0_121 = arith.constant 0 : index
    %c0_122 = arith.constant 0 : index
    %362 = vector.load %arg6[%c0_121, %c0_122] : memref<8x128xf32, #tpu.memory_space<vmem>>, vector<8x128xf32>
    tpu.vector_store %arg6[%c0_121, %c0_122], %361 {strides = array<i32>} : memref<8x128xf32, #tpu.memory_space<vmem>>, vector<8x128xf32>,
    return
  }
  func.func @transform_0(%arg0: i32, %arg1: memref<8xi32, #tpu.memory_space<smem>>, %arg2: memref<8xi32, #tpu.memory_space<smem>>, %arg3: memref<40xi32, #tpu.memory_space<smem>>) -> (i32, i32) {
    %c0_i32 = arith.constant 0 : i32
    %c0_i32_0 = arith.constant 0 : i32
    %c0_i32_1 = arith.constant 0 : i32
    return %c0_i32, %c0_i32_0 : i32, i32
  }
  func.func @transform_1(%arg0: i32, %arg1: memref<8xi32, #tpu.memory_space<smem>>, %arg2: memref<8xi32, #tpu.memory_space<smem>>, %arg3: memref<40xi32, #tpu.memory_space<smem>>) -> (i32, i32) {
    %c0_i32 = arith.constant 0 : i32
    %c0_i32_0 = arith.constant 0 : i32
    %c0_i32_1 = arith.constant 0 : i32
    return %c0_i32, %c0_i32_0 : i32, i32
  }
  func.func @transform_2(%arg0: i32, %arg1: memref<8xi32, #tpu.memory_space<smem>>, %arg2: memref<8xi32, #tpu.memory_space<smem>>, %arg3: memref<40xi32, #tpu.memory_space<smem>>) -> (i32, i32) {
    %c0_i32 = arith.constant 0 : i32
    %c0_i32_0 = arith.constant 0 : i32
    return %arg0, %c0_i32 : i32, i32
  }
}

</mosaic_0001>

<llo_original>
// kernel: skipgram_loss.1
$region0: #{skipgram_loss.1}
  #allocation0 [shape = 'u32[]', space=smem, size = 0x4, offset = 0x4, fixed_abs, tag = 'smem constant byte address 0x4 - core index']
  #allocation1 [shape = 'u32[72,128]{1,0:T(1,128)}', space=vmem, size = 0x9000, scoped, tag = 'internal scratch']
  #allocation2 [shape = 's32[1]{0}', space=sflag, size = 0x4, scoped, tag = 'scoped memory for skipgram_loss.1']
  #allocation3 [shape = 'u8[512]{0}', space=smem, size = 0x200, scoped, tag = 'prefetched SMEM operand 0']
  #allocation4 [shape = 'u8[512]{0}', space=smem, size = 0x200, scoped, tag = 'prefetched SMEM operand 1']
  #allocation5 [shape = 'u8[512]{0}', space=smem, size = 0x200, scoped, tag = 'prefetched SMEM operand 2']
  %s0 = inlined_call_operand.vmem [shape: s32[8], index: 0, kind: input, shape index: {}]
  %s1 = inlined_call_operand.vmem [shape: s32[8], index: 1, kind: input, shape index: {}]
  %s2 = inlined_call_operand.vmem [shape: s32[40], index: 2, kind: input, shape index: {}]
  %s3 = inlined_call_operand.vmem [shape: f32[50,32], index: 3, kind: input, shape index: {}]
  %s4 = inlined_call_operand.vmem [shape: f32[50,32], index: 4, kind: input, shape index: {}]
  %s5 = inlined_call_operand.vmem [shape: f32[8,128], index: 5, kind: output, shape index: {}]
  %s6 = sld [smem:[#allocation0]]
  $region18: #{skipgram_loss.1} parent=0
    _
  %s8 = ssub.s32 1, %s6
  %s9 = scalar_select 0, %s8, %s6
  %s11 = sshll.u32 %s0, 4
  %s12 = int_to_ptr.vmem [resolvable:$true] %s11
  %14 = dma.vmem_to_smem %s12, 16, [#allocation3], [#allocation2]
  %s16 = sshll.u32 %s1, 4
  %s17 = int_to_ptr.vmem [resolvable:$true] %s16
  %19 = dma.vmem_to_smem %s17, 16, [#allocation4], [#allocation2]
  %s21 = sshll.u32 %s2, 4
  %s22 = int_to_ptr.vmem [resolvable:$true] %s21
  %24 = dma.vmem_to_smem %s22, 16, [#allocation5], [#allocation2]
  %26 = dma.done [#allocation2], 48
  %27 = sfence
  // Predicated region
  $region2: #{skipgram_loss.1} parent=0 // pred_check
    _
  $region3: #{skipgram_loss.1} parent=0 // pred_check_branch
    %29 = sbr.rel (0) target = $region5
  $region4: #{skipgram_loss.1} parent=0 // pred_region
    _
  $region5: #{skipgram_loss.1} parent=0 // pred_fallthru
    _
  // Predicated region
  $region6: #{skipgram_loss.1} parent=0 // pred_check
    _
  $region7: #{skipgram_loss.1} parent=0 // pred_check_branch
    %31 = sbr.rel (0) target = $region9
  $region8: #{skipgram_loss.1} parent=0 // pred_region
    _
  $region9: #{skipgram_loss.1} parent=0 // pred_fallthru
    _
  %s32 = smul.u32 0, 8
  %s33 = sld [smem:[#allocation3 + %s32]]
  %s34 = sld [smem:[#allocation4 + %s32]]
  %s35 = scalar_lea.vmem %s3, %s33
  %v36 = vld [vmem:[%s35] sm:$0x1]
  %s37 = scalar_lea.vmem %s4, %s34
  %v38 = vld [vmem:[%s37] sm:$0x1]
  %s39 = smul.u32 0, 40
  %s40 = sld [smem:[#allocation5 + %s39]]
  %s41 = scalar_lea.vmem %s4, %s40
  %v42 = vld [vmem:[%s41] sm:$0x1]
  %s43 = sadd.s32 %s39, 1
  %s44 = sld [smem:[#allocation5 + %s43]]
  %s45 = scalar_lea.vmem %s4, %s44
  %v46 = vld [vmem:[%s45] sm:$0x1]
  %v47 = vadd.f32 %v42, %v46
  %s48 = sadd.s32 %s39, 2
  %s49 = sld [smem:[#allocation5 + %s48]]
  %s50 = scalar_lea.vmem %s4, %s49
  %v51 = vld [vmem:[%s50] sm:$0x1]
  %v52 = vadd.f32 %v47, %v51
  %s53 = sadd.s32 %s39, 3
  %s54 = sld [smem:[#allocation5 + %s53]]
  %s55 = scalar_lea.vmem %s4, %s54
  %v56 = vld [vmem:[%s55] sm:$0x1]
  %v57 = vadd.f32 %v52, %v56
  %s58 = sadd.s32 %s39, 4
  %s59 = sld [smem:[#allocation5 + %s58]]
  %s60 = scalar_lea.vmem %s4, %s59
  %v61 = vld [vmem:[%s60] sm:$0x1]
  %v62 = vadd.f32 %v57, %v61
  %s63 = sadd.s32 %s32, 1
  %s64 = sld [smem:[#allocation3 + %s63]]
  %s65 = sld [smem:[#allocation4 + %s63]]
  %s66 = scalar_lea.vmem %s3, %s64
  %v67 = vld [vmem:[%s66] sm:$0x1]
  %s68 = scalar_lea.vmem %s4, %s65
  %v69 = vld [vmem:[%s68] sm:$0x1]
  %s70 = smul.u32 %s63, 5
  %s71 = sld [smem:[#allocation5 + %s70]]
  %s72 = scalar_lea.vmem %s4, %s71
  %v73 = vld [vmem:[%s72] sm:$0x1]
  %s74 = sadd.s32 %s70, 1
  %s75 = sld [smem:[#allocation5 + %s74]]
  %s76 = scalar_lea.vmem %s4, %s75
  %v77 = vld [vmem:[%s76] sm:$0x1]
  %v78 = vadd.f32 %v73, %v77
  %s79 = sadd.s32 %s70, 2
  %s80 = sld [smem:[#allocation5 + %s79]]
  %s81 = scalar_lea.vmem %s4, %s80
  %v82 = vld [vmem:[%s81] sm:$0x1]
  %v83 = vadd.f32 %v78, %v82
  %s84 = sadd.s32 %s70, 3
  %s85 = sld [smem:[#allocation5 + %s84]]
  %s86 = scalar_lea.vmem %s4, %s85
  %v87 = vld [vmem:[%s86] sm:$0x1]
  %v88 = vadd.f32 %v83, %v87
  %s89 = sadd.s32 %s70, 4
  %s90 = sld [smem:[#allocation5 + %s89]]
  %s91 = scalar_lea.vmem %s4, %s90
  %v92 = vld [vmem:[%s91] sm:$0x1]
  %v93 = vadd.f32 %v88, %v92
  %s94 = sadd.s32 %s32, 2
  %s95 = sld [smem:[#allocation3 + %s94]]
  %s96 = sld [smem:[#allocation4 + %s94]]
  %s97 = scalar_lea.vmem %s3, %s95
  %v98 = vld [vmem:[%s97] sm:$0x1]
  %s99 = scalar_lea.vmem %s4, %s96
  %v100 = vld [vmem:[%s99] sm:$0x1]
  %s101 = smul.u32 %s94, 5
  %s102 = sld [smem:[#allocation5 + %s101]]
  %s103 = scalar_lea.vmem %s4, %s102
  %v104 = vld [vmem:[%s103] sm:$0x1]
  %s105 = sadd.s32 %s101, 1
  %s106 = sld [smem:[#allocation5 + %s105]]
  %s107 = scalar_lea.vmem %s4, %s106
  %v108 = vld [vmem:[%s107] sm:$0x1]
  %v109 = vadd.f32 %v104, %v108
  %s110 = sadd.s32 %s101, 2
  %s111 = sld [smem:[#allocation5 + %s110]]
  %s112 = scalar_lea.vmem %s4, %s111
  %v113 = vld [vmem:[%s112] sm:$0x1]
  %v114 = vadd.f32 %v109, %v113
  %s115 = sadd.s32 %s101, 3
  %s116 = sld [smem:[#allocation5 + %s115]]
  %s117 = scalar_lea.vmem %s4, %s116
  %v118 = vld [vmem:[%s117] sm:$0x1]
  %v119 = vadd.f32 %v114, %v118
  %s120 = sadd.s32 %s101, 4
  %s121 = sld [smem:[#allocation5 + %s120]]
  %s122 = scalar_lea.vmem %s4, %s121
  %v123 = vld [vmem:[%s122] sm:$0x1]
  %v124 = vadd.f32 %v119, %v123
  %s125 = sadd.s32 %s32, 3
  %s126 = sld [smem:[#allocation3 + %s125]]
  %s127 = sld [smem:[#allocation4 + %s125]]
  %s128 = scalar_lea.vmem %s3, %s126
  %v129 = vld [vmem:[%s128] sm:$0x1]
  %s130 = scalar_lea.vmem %s4, %s127
  %v131 = vld [vmem:[%s130] sm:$0x1]
  %s132 = smul.u32 %s125, 5
  %s133 = sld [smem:[#allocation5 + %s132]]
  %s134 = scalar_lea.vmem %s4, %s133
  %v135 = vld [vmem:[%s134] sm:$0x1]
  %s136 = sadd.s32 %s132, 1
  %s137 = sld [smem:[#allocation5 + %s136]]
  %s138 = scalar_lea.vmem %s4, %s137
  %v139 = vld [vmem:[%s138] sm:$0x1]
  %v140 = vadd.f32 %v135, %v139
  %s141 = sadd.s32 %s132, 2
  %s142 = sld [smem:[#allocation5 + %s141]]
  %s143 = scalar_lea.vmem %s4, %s142
  %v144 = vld [vmem:[%s143] sm:$0x1]
  %v145 = vadd.f32 %v140, %v144
  %s146 = sadd.s32 %s132, 3
  %s147 = sld [smem:[#allocation5 + %s146]]
  %s148 = scalar_lea.vmem %s4, %s147
  %v149 = vld [vmem:[%s148] sm:$0x1]
  %v150 = vadd.f32 %v145, %v149
  %s151 = sadd.s32 %s132, 4
  %s152 = sld [smem:[#allocation5 + %s151]]
  %s153 = scalar_lea.vmem %s4, %s152
  %v154 = vld [vmem:[%s153] sm:$0x1]
  %v155 = vadd.f32 %v150, %v154
  %s156 = sadd.s32 %s32, 4
  %s157 = sld [smem:[#allocation3 + %s156]]
  %s158 = sld [smem:[#allocation4 + %s156]]
  %s159 = scalar_lea.vmem %s3, %s157
  %v160 = vld [vmem:[%s159] sm:$0x1]
  %s161 = scalar_lea.vmem %s4, %s158
  %v162 = vld [vmem:[%s161] sm:$0x1]
  %s163 = smul.u32 %s156, 5
  %s164 = sld [smem:[#allocation5 + %s163]]
  %s165 = scalar_lea.vmem %s4, %s164
  %v166 = vld [vmem:[%s165] sm:$0x1]
  %s167 = sadd.s32 %s163, 1
  %s168 = sld [smem:[#allocation5 + %s167]]
  %s169 = scalar_lea.vmem %s4, %s168
  %v170 = vld [vmem:[%s169] sm:$0x1]
  %v171 = vadd.f32 %v166, %v170
  %s172 = sadd.s32 %s163, 2
  %s173 = sld [smem:[#allocation5 + %s172]]
  %s174 = scalar_lea.vmem %s4, %s173
  %v175 = vld [vmem:[%s174] sm:$0x1]
  %v176 = vadd.f32 %v171, %v175
  %s177 = sadd.s32 %s163, 3
  %s178 = sld [smem:[#allocation5 + %s177]]
  %s179 = scalar_lea.vmem %s4, %s178
  %v180 = vld [vmem:[%s179] sm:$0x1]
  %v181 = vadd.f32 %v176, %v180
  %s182 = sadd.s32 %s163, 4
  %s183 = sld [smem:[#allocation5 + %s182]]
  %s184 = scalar_lea.vmem %s4, %s183
  %v185 = vld [vmem:[%s184] sm:$0x1]
  %v186 = vadd.f32 %v181, %v185
  %s187 = sadd.s32 %s32, 5
  %s188 = sld [smem:[#allocation3 + %s187]]
  %s189 = sld [smem:[#allocation4 + %s187]]
  %s190 = scalar_lea.vmem %s3, %s188
  %v191 = vld [vmem:[%s190] sm:$0x1]
  %s192 = scalar_lea.vmem %s4, %s189
  %v193 = vld [vmem:[%s192] sm:$0x1]
  %s194 = smul.u32 %s187, 5
  %s195 = sld [smem:[#allocation5 + %s194]]
  %s196 = scalar_lea.vmem %s4, %s195
  %v197 = vld [vmem:[%s196] sm:$0x1]
  %s198 = sadd.s32 %s194, 1
  %s199 = sld [smem:[#allocation5 + %s198]]
  %s200 = scalar_lea.vmem %s4, %s199
  %v201 = vld [vmem:[%s200] sm:$0x1]
  %v202 = vadd.f32 %v197, %v201
  %s203 = sadd.s32 %s194, 2
  %s204 = sld [smem:[#allocation5 + %s203]]
  %s205 = scalar_lea.vmem %s4, %s204
  %v206 = vld [vmem:[%s205] sm:$0x1]
  %v207 = vadd.f32 %v202, %v206
  %s208 = sadd.s32 %s194, 3
  %s209 = sld [smem:[#allocation5 + %s208]]
  %s210 = scalar_lea.vmem %s4, %s209
  %v211 = vld [vmem:[%s210] sm:$0x1]
  %v212 = vadd.f32 %v207, %v211
  %s213 = sadd.s32 %s194, 4
  %s214 = sld [smem:[#allocation5 + %s213]]
  %s215 = scalar_lea.vmem %s4, %s214
  %v216 = vld [vmem:[%s215] sm:$0x1]
  %v217 = vadd.f32 %v212, %v216
  %s218 = sadd.s32 %s32, 6
  %s219 = sld [smem:[#allocation3 + %s218]]
  %s220 = sld [smem:[#allocation4 + %s218]]
  %s221 = scalar_lea.vmem %s3, %s219
  %v222 = vld [vmem:[%s221] sm:$0x1]
  %s223 = scalar_lea.vmem %s4, %s220
  %v224 = vld [vmem:[%s223] sm:$0x1]
  %s225 = smul.u32 %s218, 5
  %s226 = sld [smem:[#allocation5 + %s225]]
  %s227 = scalar_lea.vmem %s4, %s226
  %v228 = vld [vmem:[%s227] sm:$0x1]
  %s229 = sadd.s32 %s225, 1
  %s230 = sld [smem:[#allocation5 + %s229]]
  %s231 = scalar_lea.vmem %s4, %s230
  %v232 = vld [vmem:[%s231] sm:$0x1]
  %v233 = vadd.f32 %v228, %v232
  %s234 = sadd.s32 %s225, 2
  %s235 = sld [smem:[#allocation5 + %s234]]
  %s236 = scalar_lea.vmem %s4, %s235
  %v237 = vld [vmem:[%s236] sm:$0x1]
  %v238 = vadd.f32 %v233, %v237
  %s239 = sadd.s32 %s225, 3
  %s240 = sld [smem:[#allocation5 + %s239]]
  %s241 = scalar_lea.vmem %s4, %s240
  %v242 = vld [vmem:[%s241] sm:$0x1]
  %v243 = vadd.f32 %v238, %v242
  %s244 = sadd.s32 %s225, 4
  %s245 = sld [smem:[#allocation5 + %s244]]
  %s246 = scalar_lea.vmem %s4, %s245
  %v247 = vld [vmem:[%s246] sm:$0x1]
  %v248 = vadd.f32 %v243, %v247
  %s249 = sadd.s32 %s32, 7
  %s250 = sld [smem:[#allocation3 + %s249]]
  %s251 = sld [smem:[#allocation4 + %s249]]
  %s252 = scalar_lea.vmem %s3, %s250
  %v253 = vld [vmem:[%s252] sm:$0x1]
  %s254 = scalar_lea.vmem %s4, %s251
  %v255 = vld [vmem:[%s254] sm:$0x1]
  %s256 = smul.u32 %s249, 5
  %s257 = sld [smem:[#allocation5 + %s256]]
  %s258 = scalar_lea.vmem %s4, %s257
  %v259 = vld [vmem:[%s258] sm:$0x1]
  %s260 = sadd.s32 %s256, 1
  %s261 = sld [smem:[#allocation5 + %s260]]
  %s262 = scalar_lea.vmem %s4, %s261
  %v263 = vld [vmem:[%s262] sm:$0x1]
  %v264 = vadd.f32 %v259, %v263
  %s265 = sadd.s32 %s256, 2
  %s266 = sld [smem:[#allocation5 + %s265]]
  %s267 = scalar_lea.vmem %s4, %s266
  %v268 = vld [vmem:[%s267] sm:$0x1]
  %v269 = vadd.f32 %v264, %v268
  %s270 = sadd.s32 %s256, 3
  %s271 = sld [smem:[#allocation5 + %s270]]
  %s272 = scalar_lea.vmem %s4, %s271
  %v273 = vld [vmem:[%s272] sm:$0x1]
  %v274 = vadd.f32 %v269, %v273
  %s275 = sadd.s32 %s256, 4
  %s276 = sld [smem:[#allocation5 + %s275]]
  %s277 = scalar_lea.vmem %s4, %s276
  %v278 = vld [vmem:[%s277] sm:$0x1]
  %v279 = vadd.f32 %v274, %v278
  %v281 = vrot.slane %v67, 7
  %v284 = vrot.slane %v98, 6
  %v287 = vrot.slane %v129, 5
  %v290 = vrot.slane %v160, 4
  %v293 = vrot.slane %v191, 3
  %v296 = vrot.slane %v222, 2
  %v299 = vrot.slane %v253, 1
  %vm301 = vcmask 1040384
  %v302 = vsel %vm301, %v36, %v281
  %vm303 = vcmask 1041408
  %v304 = vsel %vm303, %v302, %v284
  %vm305 = vcmask 1042432
  %v306 = vsel %vm305, %v304, %v287
  %vm307 = vcmask 1043456
  %v308 = vsel %vm307, %v306, %v290
  %vm309 = vcmask 1044480
  %v310 = vsel %vm309, %v308, %v293
  %vm311 = vcmask 1045504
  %v312 = vsel %vm311, %v310, %v296
  %vm313 = vcmask 1046528
  %v314 = vsel %vm313, %v312, %v299
  %v316 = vrot.slane %v69, 7
  %v319 = vrot.slane %v100, 6
  %v322 = vrot.slane %v131, 5
  %v325 = vrot.slane %v162, 4
  %v328 = vrot.slane %v193, 3
  %v331 = vrot.slane %v224, 2
  %v334 = vrot.slane %v255, 1
  %v336 = vsel %vm301, %v38, %v316
  %v337 = vsel %vm303, %v336, %v319
  %v338 = vsel %vm305, %v337, %v322
  %v339 = vsel %vm307, %v338, %v325
  %v340 = vsel %vm309, %v339, %v328
  %v341 = vsel %vm311, %v340, %v331
  %v342 = vsel %vm313, %v341, %v334
  %v344 = vrot.slane %v93, 7
  %v347 = vrot.slane %v124, 6
  %v350 = vrot.slane %v155, 5
  %v353 = vrot.slane %v186, 4
  %v356 = vrot.slane %v217, 3
  %v359 = vrot.slane %v248, 2
  %v362 = vrot.slane %v279, 1
  %v364 = vsel %vm301, %v62, %v344
  %v365 = vsel %vm303, %v364, %v347
  %v366 = vsel %vm305, %v365, %v350
  %v367 = vsel %vm307, %v366, %v353
  %v368 = vsel %vm309, %v367, %v356
  %v369 = vsel %vm311, %v368, %v359
  %v370 = vsel %vm313, %v369, %v362
  %v371 = vmul.f32 %v314, %v342
  %vm372 = vcmask 261120
  %v373 = vsel %vm372, %v371, 0.0
  %374 = vadd.xlane.f32.xlu0 %v373
  %v375 = vpop.xlane.xlu0 %374
  %v376 = vmul.f32 %v314, %v370
  %v377 = vsel %vm372, %v376, 0.0
  %378 = vadd.xlane.f32.xlu0 %v377
  %v379 = vpop.xlane.xlu0 %378
  %v380 = vmin.f32 %v375, 0.0
  %v381 = vand.u32 2147483647, %v375
  %v382 = vsub.f32 0.0, %v381
  %v383 = vmul.f32 %v382, 1.442695
  %v384 = vpow.pop %v383
  %v385 = vadd.f32 %v384, 1.0
  %v386 = vlog2.pop %v385
  %v387 = vmul.f32 %v386, 0.6931472
  %v388 = vsub.f32 %v380, %v387
  %v389 = vsub.f32 0.0, %v379
  %v390 = vmin.f32 %v389, 0.0
  %v391 = vand.u32 2147483647, %v389
  %v392 = vsub.f32 0.0, %v391
  %v393 = vmul.f32 %v392, 1.442695
  %v394 = vpow.pop %v393
  %v395 = vadd.f32 %v394, 1.0
  %v396 = vlog2.pop %v395
  %v397 = vmul.f32 %v396, 0.6931472
  %v398 = vsub.f32 %v390, %v397
  %v399 = vadd.f32 %v388, %v398
  %v400 = vlaneseq
  %v401 = vshrl.u32 %v400, 7
  %v402 = vstv %s32
  %v403 = vadd.s32 %v402, %v401
  %vm404 = vcmp.lt.s32.totalorder %v403, 8
  %v405 = vsel %vm404, %v399, 0.0
  %406 = vst [vmem:[%s5] sm:$0xff] %v405
  // Predicated region
  $region10: #{skipgram_loss.1} parent=0 // pred_check
    _
  $region11: #{skipgram_loss.1} parent=0 // pred_check_branch
    %408 = sbr.rel (0) target = $region13
  $region12: #{skipgram_loss.1} parent=0 // pred_region
    _
  $region13: #{skipgram_loss.1} parent=0 // pred_fallthru
    _
  // Predicated region
  $region14: #{skipgram_loss.1} parent=0 // pred_check
    _
  $region15: #{skipgram_loss.1} parent=0 // pred_check_branch
    %410 = sbr.rel (0) target = $region17
  $region16: #{skipgram_loss.1} parent=0 // pred_region
    _
  $region17: #{skipgram_loss.1} parent=0 // pred_fallthru
    _

</llo_original>
